<compile_context>
chip_gen: v6e
topology: v6e:2x2x1
jax: 0.10.0
libtpu: 0.0.40
codegen_flags: <defaults>
</compile_context>

<pallas_src>
import jax
import jax.numpy as jnp
from jax.experimental import pallas as pl
from jax.experimental.pallas import tpu as pltpu

LANE = 128
_MIB = 1024 * 1024


def _round_up(x, m):
    return ((x + m - 1) // m) * m


def _tpu_hints():
    """(two_cores, vmem_capacity_bytes, batch_tile_cap) for the local TPU."""
    kind = ""
    try:
        kind = jax.devices()[0].device_kind.lower()
    except Exception:  # pragma: no cover - CPU/interpret fallback
        pass
    two_cores = "v7" in kind                      # v7x: 2 TensorCores / chip
    vmem_cap = 64 * _MIB if two_cores else 128 * _MIB
    try:
        info = pltpu.get_tpu_info()
        vmem_cap = int(getattr(info, "vmem_capacity_bytes", vmem_cap))
    except Exception:
        pass
    tb_cap = 512 if two_cores else 1024           # v6e/v5e: bigger tiles OK
    return two_cores, vmem_cap, tb_cap


def _pick_tb(b_pad, *, cap, two_cores):
    """Batch tile: whole (16-padded) batch when tiny, else a 128-multiple
    divisor of the 128-padded batch.  On 2-TC parts force >=2 grid steps."""
    if b_pad <= 128:
        return b_pad
    limit = min(cap, b_pad)
    if two_cores and b_pad >= 256:
        limit = min(limit, b_pad // 2)            # leave work for both cores
    limit = max(128, (limit // 128) * 128)
    for tile in range(limit, 127, -128):
        if b_pad % tile == 0:
            return tile
    return 128


def mlp_kernel(alpha_ref,               # SMEM: (3,) PReLU slopes (f32)
               x_ref,                   # (TB, K_PAD)        compute dtype (bf16)
               w1s_ref, b1s_ref,        # (K_PAD, 2*NP) bf16, (1, 2*NP) f32  [w1|ws]
               w2_ref, b2_ref,          # (NP, NP) bf16,      (1, NP) f32
               w3_ref, b3_ref,          # (NP, NP) bf16,      (1, NP) f32
               o_ref):                  # (TB, NP)            output dtype
    n_pad = w2_ref.shape[0]
    a1 = alpha_ref[0]
    a2 = alpha_ref[1]
    a3 = alpha_ref[2]

    x = x_ref[...]

    # Fused first matmul: one lane-dense bf16 MXU pass produces [h1 | shortcut],
    # accumulated in f32.
    hs = jnp.dot(x, w1s_ref[...], preferred_element_type=jnp.float32) + b1s_ref[...]
    h = hs[:, :n_pad]       # fcs branch, layer-1 pre-activation (f32)
    s = hs[:, n_pad:]       # shortcut branch output (f32)

    h = jnp.where(h > 0, h, a1 * h)
    h = jnp.dot(h.astype(w2_ref.dtype), w2_ref[...],
                preferred_element_type=jnp.float32) + b2_ref[...]
    h = jnp.where(h > 0, h, a2 * h)
    h = jnp.dot(h.astype(w3_ref.dtype), w3_ref[...],
                preferred_element_type=jnp.float32) + b3_ref[...]
    h = jnp.where(h > 0, h, a3 * h)

    o_ref[...] = (h + s).astype(o_ref.dtype)


def pack_params(p, *, compute_dtype=jnp.bfloat16):
    """Zero-pad K and N to 128-lane multiples, fuse [w1|ws] / [b1|bs], and cast
    weights once to the MXU-native compute dtype (biases stay f32 for the
    f32-accumulator bias add).  Padding is numerically exact."""
    in_dim, out_dim = p["w1"].shape
    k_pad = max(LANE, _round_up(in_dim, LANE))
    n_pad = max(LANE, _round_up(out_dim, LANE))

    def pad2(a, rows, cols):
        return jnp.pad(a, ((0, rows - a.shape[0]), (0, cols - a.shape[1])))

    w1s = jnp.concatenate([pad2(p["w1"], k_pad, n_pad),
                           pad2(p["ws"], k_pad, n_pad)], axis=1)
    b1s = jnp.concatenate([pad2(p["b1"], 1, n_pad),
                           pad2(p["bs"], 1, n_pad)], axis=1)
    return dict(
        w1s=w1s.astype(compute_dtype),
        b1s=b1s.astype(jnp.float32),
        w2=pad2(p["w2"], n_pad, n_pad).astype(compute_dtype),
        b2=pad2(p["b2"], 1, n_pad).astype(jnp.float32),
        w3=pad2(p["w3"], n_pad, n_pad).astype(compute_dtype),
        b3=pad2(p["b3"], 1, n_pad).astype(jnp.float32),
        alphas=p["alphas"].astype(jnp.float32),
        in_dim=in_dim, out_dim=out_dim, k_pad=k_pad, n_pad=n_pad)


def mlp_forward(x, params, *, tb=None, compute_dtype=jnp.bfloat16):
    """params: dict with w1,b1,w2,b2,w3,b3,ws,bs ([in,out]-layout) and alphas (3,)."""
    pk = pack_params(params, compute_dtype=compute_dtype)
    B, in_dim = x.shape
    assert in_dim == pk["in_dim"]
    k_pad, n_pad, out_dim = pk["k_pad"], pk["n_pad"], pk["out_dim"]
    out_dtype = x.dtype

    two_cores, vmem_cap, tb_cap = _tpu_hints()

    # Batch padding: 16-row multiples for bf16 sublane packing; 128-multiples
    # once we tile, so every tile is full (no single whole-batch fallback).
    b_pad = _round_up(B, 16)
    if b_pad > 128:
        b_pad = _round_up(b_pad, 128)
    if tb is None:
        tb = _pick_tb(b_pad, cap=tb_cap, two_cores=two_cores)
    b_pad = _round_up(b_pad, tb)

    # Cast x once to the MXU dtype (halves its DMA bytes) and zero-pad B/K.
    x_c = x.astype(compute_dtype)
    if (b_pad, k_pad) != (B, in_dim):
        x_c = jnp.pad(x_c, ((0, b_pad - B), (0, k_pad - in_dim)))

    full = lambda i: (0, 0)  # noqa: E731  (grid-invariant weight blocks)

    # Grid-invariant blocks: single-buffer them (double-buffering constants
    # only wastes VMEM -- matters under v7x's 64 MiB budget at real sizes).
    if hasattr(pl, "Buffered"):
        wspec = lambda shape: pl.BlockSpec(shape, full, pipeline_mode=pl.Buffered(1))  # noqa: E731
    else:  # older JAX fallback
        wspec = lambda shape: pl.BlockSpec(shape, full)  # noqa: E731

    # Advisory cost hint (dtype-aware byte counts).
    nbytes = lambda a: a.size * a.dtype.itemsize  # noqa: E731
    flops = 2 * b_pad * (k_pad * 2 * n_pad + 2 * n_pad * n_pad)
    bytes_accessed = (nbytes(x_c) + b_pad * n_pad * jnp.dtype(out_dtype).itemsize
                      + nbytes(pk["w1s"]) + nbytes(pk["b1s"])
                      + nbytes(pk["w2"]) + nbytes(pk["b2"])
                      + nbytes(pk["w3"]) + nbytes(pk["b3"]))

    # Scoped-VMEM limit: v5e's 16 MiB default is too small once tiles/weights
    # grow; leave headroom below physical capacity (v7x is only 64 MiB).
    vmem_limit = max(32 * _MIB, min(112 * _MIB, vmem_cap - 16 * _MIB))

    out_padded = pl.pallas_call(
        mlp_kernel,
        out_shape=jax.ShapeDtypeStruct((b_pad, n_pad), out_dtype),
        grid_spec=pltpu.PrefetchScalarGridSpec(
            num_scalar_prefetch=0,
            grid=(b_pad // tb,),
            in_specs=[
                pl.BlockSpec(memory_space=pltpu.MemorySpace.SMEM),   # alphas
                pl.BlockSpec((tb, k_pad), lambda i: (i, 0)),         # x tile
                wspec((k_pad, 2 * n_pad)),                           # [w1 | ws]
                wspec((1, 2 * n_pad)),                               # [b1 | bs]
                wspec((n_pad, n_pad)),                               # w2
                wspec((1, n_pad)),                                   # b2
                wspec((n_pad, n_pad)),                               # w3
                wspec((1, n_pad)),                                   # b3
            ],
            out_specs=pl.BlockSpec((tb, n_pad), lambda i: (i, 0)),
        ),
        compiler_params=pltpu.CompilerParams(
            dimension_semantics=("parallel",),
            vmem_limit_bytes=int(vmem_limit)),
        cost_estimate=pl.CostEstimate(flops=flops, transcendentals=0,
                                      bytes_accessed=int(bytes_accessed)),
    )(pk["alphas"], x_c,
      pk["w1s"], pk["b1s"],
      pk["w2"], pk["b2"],
      pk["w3"], pk["b3"])

    # Slice only when padding actually happened (the slice is a full HBM copy).
    out = out_padded
    if b_pad != B:
        out = out[:B]
    if n_pad != out_dim:
        out = out[:, :out_dim]
    return out


def init_params(key, in_dim, out_dim):
    ks = jax.random.split(key, 8)

    def lin(kw, kb, fan_in, fan_out):
        bound = 1.0 / jnp.sqrt(fan_in)
        w = jax.random.uniform(kw, (fan_in, fan_out), jnp.float32, -bound, bound)
        b = jax.random.uniform(kb, (1, fan_out), jnp.float32, -bound, bound)
        return w, b

    w1, b1 = lin(ks[0], ks[1], in_dim, out_dim)
    w2, b2 = lin(ks[2], ks[3], out_dim, out_dim)
    w3, b3 = lin(ks[4], ks[5], out_dim, out_dim)
    ws, bs = lin(ks[6], ks[7], in_dim, out_dim)
    # PReLU default: single parameter per layer, init = 0.25
    alphas = jnp.full((3,), 0.25, dtype=jnp.float32)
    return dict(w1=w1, b1=b1, w2=w2, b2=b2, w3=w3, b3=b3,
                ws=ws, bs=bs, alphas=alphas)


def mlp_reference(x, p):
    def prelu(h, a):
        return jnp.where(h > 0, h, a * h)
    h = prelu(x @ p["w1"] + p["b1"], p["alphas"][0])
    h = prelu(h @ p["w2"] + p["b2"], p["alphas"][1])
    h = prelu(h @ p["w3"] + p["b3"], p["alphas"][2])
    return h + (x @ p["ws"] + p["bs"])


if __name__ == "__main__":
    key = jax.random.PRNGKey(0)
    k_x, k_p = jax.random.split(key)

    batch, in_dim, out_dim = 16, 32, 32
    x = jax.random.normal(k_x, (batch, in_dim), dtype=jnp.float32)
    params = init_params(k_p, in_dim, out_dim)

    out = mlp_forward(x, params)             # tb -> whole 16-row batch, grid=(1,)
    out = jax.block_until_ready(out)

    ref = mlp_reference(x, params)           # f32 reference
    assert out.shape == (batch, out_dim)
    # bf16 MXU operands with f32 accumulation -> loose tolerance vs f32 reference.
    max_err = float(jnp.max(jnp.abs(out - ref)))
    assert jnp.allclose(out, ref, atol=5e-2, rtol=5e-2), \
        f"mismatch vs reference (max |err|={max_err})"

    print("KERNEL_OK")
</pallas_src>

<mosaic_0001>
module attributes {stable_mosaic.version = 11 : i64} {
  func.func @mlp_kernel(%arg0: i32, %arg1: memref<3xf32, #tpu.memory_space<smem>>, %arg2: memref<16x128xbf16, #tpu.memory_space<vmem>>, %arg3: memref<128x256xbf16, #tpu.memory_space<vmem>>, %arg4: memref<1x256xf32, #tpu.memory_space<vmem>>, %arg5: memref<128x128xbf16, #tpu.memory_space<vmem>>, %arg6: memref<1x128xf32, #tpu.memory_space<vmem>>, %arg7: memref<128x128xbf16, #tpu.memory_space<vmem>>, %arg8: memref<1x128xf32, #tpu.memory_space<vmem>>, %arg9: memref<16x128xf32, #tpu.memory_space<vmem>>) attributes {dimension_semantics = [#tpu.dimension_semantics<parallel>], iteration_bounds = array<i64: 1>, scalar_prefetch = 0 : i64, scratch_operands = 0 : i64, tpu.core_type = #tpu.core_type<tc>, window_params = [{transform_indices = @transform_0, window_bounds = array<i64: 3>}, {transform_indices = @transform_1, window_bounds = array<i64: 16, 128>}, {pipeline_mode = #tpu.pipeline_mode<synchronous>, transform_indices = @transform_2, window_bounds = array<i64: 128, 256>}, {pipeline_mode = #tpu.pipeline_mode<synchronous>, transform_indices = @transform_3, window_bounds = array<i64: 1, 256>}, {pipeline_mode = #tpu.pipeline_mode<synchronous>, transform_indices = @transform_4, window_bounds = array<i64: 128, 128>}, {pipeline_mode = #tpu.pipeline_mode<synchronous>, transform_indices = @transform_5, window_bounds = array<i64: 1, 128>}, {pipeline_mode = #tpu.pipeline_mode<synchronous>, transform_indices = @transform_6, window_bounds = array<i64: 128, 128>}, {pipeline_mode = #tpu.pipeline_mode<synchronous>, transform_indices = @transform_7, window_bounds = array<i64: 1, 128>}, {transform_indices = @transform_8, window_bounds = array<i64: 16, 128>}]} {
    %c0 = arith.constant 0 : index
    %0 = memref.load %arg1[%c0] : memref<3xf32, #tpu.memory_space<smem>>
    %c1 = arith.constant 1 : index
    %1 = memref.load %arg1[%c1] : memref<3xf32, #tpu.memory_space<smem>>
    %c2 = arith.constant 2 : index
    %2 = memref.load %arg1[%c2] : memref<3xf32, #tpu.memory_space<smem>>
    %c0_0 = arith.constant 0 : index
    %c0_1 = arith.constant 0 : index
    %3 = vector.load %arg2[%c0_0, %c0_1] : memref<16x128xbf16, #tpu.memory_space<vmem>>, vector<16x128xbf16>
    %c0_2 = arith.constant 0 : index
    %c0_3 = arith.constant 0 : index
    %4 = vector.load %arg3[%c0_2, %c0_3] : memref<128x256xbf16, #tpu.memory_space<vmem>>, vector<128x256xbf16>
    %cst = arith.constant dense<0.000000e+00> : vector<16x256xf32>
    %5 = tpu.matmul %3, %4, %cst {dimension_numbers = #tpu.dot_dimension_numbers<[1], [0], [0], [1], [0, 0, 1, 1], [], []>} : vector<16x128xbf16>, vector<128x256xbf16>, vector<16x256xf32> -> vector<16x256xf32>
    %c0_4 = arith.constant 0 : index
    %c0_5 = arith.constant 0 : index
    %6 = vector.load %arg4[%c0_4, %c0_5] : memref<1x256xf32, #tpu.memory_space<vmem>>, vector<1x256xf32>
    %7 = vector.broadcast %6 : vector<1x256xf32> to vector<16x256xf32>
    %8 = arith.addf %5, %7 : vector<16x256xf32>
    %9 = vector.extract_strided_slice %8 {offsets = [0, 0], sizes = [16, 128], strides = [1, 1]} : vector<16x256xf32> to vector<16x128xf32>
    %10 = vector.extract_strided_slice %8 {offsets = [0, 128], sizes = [16, 128], strides = [1, 1]} : vector<16x256xf32> to vector<16x128xf32>
    %cst_6 = arith.constant 0.000000e+00 : f32
    %11 = vector.broadcast %cst_6 : f32 to vector<16x128xf32>
    %12 = arith.cmpf ogt, %9, %11 : vector<16x128xf32>
    %13 = vector.broadcast %0 : f32 to vector<16x128xf32>
    %14 = arith.mulf %13, %9 : vector<16x128xf32>
    %15 = arith.select %12, %9, %14 : vector<16x128xi1>, vector<16x128xf32>
    %16 = arith.truncf %15 : vector<16x128xf32> to vector<16x128xbf16>
    %c0_7 = arith.constant 0 : index
    %c0_8 = arith.constant 0 : index
    %17 = vector.load %arg5[%c0_7, %c0_8] : memref<128x128xbf16, #tpu.memory_space<vmem>>, vector<128x128xbf16>
    %cst_9 = arith.constant dense<0.000000e+00> : vector<16x128xf32>
    %18 = tpu.matmul %16, %17, %cst_9 {dimension_numbers = #tpu.dot_dimension_numbers<[1], [0], [0], [1], [0, 0, 1, 1], [], []>} : vector<16x128xbf16>, vector<128x128xbf16>, vector<16x128xf32> -> vector<16x128xf32>
    %c0_10 = arith.constant 0 : index
    %c0_11 = arith.constant 0 : index
    %19 = vector.load %arg6[%c0_10, %c0_11] : memref<1x128xf32, #tpu.memory_space<vmem>>, vector<1x128xf32>
    %20 = vector.broadcast %19 : vector<1x128xf32> to vector<16x128xf32>
    %21 = arith.addf %18, %20 : vector<16x128xf32>
    %cst_12 = arith.constant 0.000000e+00 : f32
    %22 = vector.broadcast %cst_12 : f32 to vector<16x128xf32>
    %23 = arith.cmpf ogt, %21, %22 : vector<16x128xf32>
    %24 = vector.broadcast %1 : f32 to vector<16x128xf32>
    %25 = arith.mulf %24, %21 : vector<16x128xf32>
    %26 = arith.select %23, %21, %25 : vector<16x128xi1>, vector<16x128xf32>
    %27 = arith.truncf %26 : vector<16x128xf32> to vector<16x128xbf16>
    %c0_13 = arith.constant 0 : index
    %c0_14 = arith.constant 0 : index
    %28 = vector.load %arg7[%c0_13, %c0_14] : memref<128x128xbf16, #tpu.memory_space<vmem>>, vector<128x128xbf16>
    %cst_15 = arith.constant dense<0.000000e+00> : vector<16x128xf32>
    %29 = tpu.matmul %27, %28, %cst_15 {dimension_numbers = #tpu.dot_dimension_numbers<[1], [0], [0], [1], [0, 0, 1, 1], [], []>} : vector<16x128xbf16>, vector<128x128xbf16>, vector<16x128xf32> -> vector<16x128xf32>
    %c0_16 = arith.constant 0 : index
    %c0_17 = arith.constant 0 : index
    %30 = vector.load %arg8[%c0_16, %c0_17] : memref<1x128xf32, #tpu.memory_space<vmem>>, vector<1x128xf32>
    %31 = vector.broadcast %30 : vector<1x128xf32> to vector<16x128xf32>
    %32 = arith.addf %29, %31 : vector<16x128xf32>
    %cst_18 = arith.constant 0.000000e+00 : f32
    %33 = vector.broadcast %cst_18 : f32 to vector<16x128xf32>
    %34 = arith.cmpf ogt, %32, %33 : vector<16x128xf32>
    %35 = vector.broadcast %2 : f32 to vector<16x128xf32>
    %36 = arith.mulf %35, %32 : vector<16x128xf32>
    %37 = arith.select %34, %32, %36 : vector<16x128xi1>, vector<16x128xf32>
    %38 = arith.addf %37, %10 : vector<16x128xf32>
    %c0_19 = arith.constant 0 : index
    %c0_20 = arith.constant 0 : index
    %39 = vector.load %arg9[%c0_19, %c0_20] : memref<16x128xf32, #tpu.memory_space<vmem>>, vector<16x128xf32>
    tpu.vector_store %arg9[%c0_19, %c0_20], %38 {strides = array<i32>} : memref<16x128xf32, #tpu.memory_space<vmem>>, vector<16x128xf32>,
    return
  }
  func.func @transform_0(%arg0: i32) -> i32 {
    %c0_i32 = arith.constant 0 : i32
    %c0_i32_0 = arith.constant 0 : i32
    return %c0_i32 : i32
  }
  func.func @transform_1(%arg0: i32) -> (i32, i32) {
    %c0_i32 = arith.constant 0 : i32
    %c0_i32_0 = arith.constant 0 : i32
    return %arg0, %c0_i32 : i32, i32
  }
  func.func @transform_2(%arg0: i32) -> (i32, i32) {
    %c0_i32 = arith.constant 0 : i32
    %c0_i32_0 = arith.constant 0 : i32
    %c0_i32_1 = arith.constant 0 : i32
    return %c0_i32, %c0_i32_0 : i32, i32
  }
  func.func @transform_3(%arg0: i32) -> (i32, i32) {
    %c0_i32 = arith.constant 0 : i32
    %c0_i32_0 = arith.constant 0 : i32
    %c0_i32_1 = arith.constant 0 : i32
    return %c0_i32, %c0_i32_0 : i32, i32
  }
  func.func @transform_4(%arg0: i32) -> (i32, i32) {
    %c0_i32 = arith.constant 0 : i32
    %c0_i32_0 = arith.constant 0 : i32
    %c0_i32_1 = arith.constant 0 : i32
    return %c0_i32, %c0_i32_0 : i32, i32
  }
  func.func @transform_5(%arg0: i32) -> (i32, i32) {
    %c0_i32 = arith.constant 0 : i32
    %c0_i32_0 = arith.constant 0 : i32
    %c0_i32_1 = arith.constant 0 : i32
    return %c0_i32, %c0_i32_0 : i32, i32
  }
  func.func @transform_6(%arg0: i32) -> (i32, i32) {
    %c0_i32 = arith.constant 0 : i32
    %c0_i32_0 = arith.constant 0 : i32
    %c0_i32_1 = arith.constant 0 : i32
    return %c0_i32, %c0_i32_0 : i32, i32
  }
  func.func @transform_7(%arg0: i32) -> (i32, i32) {
    %c0_i32 = arith.constant 0 : i32
    %c0_i32_0 = arith.constant 0 : i32
    %c0_i32_1 = arith.constant 0 : i32
    return %c0_i32, %c0_i32_0 : i32, i32
  }
  func.func @transform_8(%arg0: i32) -> (i32, i32) {
    %c0_i32 = arith.constant 0 : i32
    %c0_i32_0 = arith.constant 0 : i32
    return %arg0, %c0_i32 : i32, i32
  }
}

</mosaic_0001>

<llo_original>
// kernel: tpu_custom_call.1
$region0: #{tpu_custom_call.1}
  #allocation0 [shape = 'u32[]', space=smem, size = 0x4, offset = 0x4, fixed_abs, tag = 'smem constant byte address 0x4 - core index']
  #allocation1 [shape = 'u32[144,128]{1,0:T(1,128)}', space=vmem, size = 0x12000, scoped, tag = 'internal scratch']
  %s0 = inlined_call_operand.hbm [shape: f32[3], index: 0, kind: input, shape index: {}]
  %s1 = inlined_call_operand.hbm [shape: bf16[16,128], index: 1, kind: input, shape index: {}]
  %s2 = inlined_call_operand.hbm [shape: bf16[128,256], index: 2, kind: input, shape index: {}]
  %s3 = inlined_call_operand.vmem [shape: f32[1,256], index: 3, kind: input, shape index: {}]
  %s4 = inlined_call_operand.hbm [shape: bf16[128,128], index: 4, kind: input, shape index: {}]
  %s5 = inlined_call_operand.vmem [shape: f32[1,128], index: 5, kind: input, shape index: {}]
  %s6 = inlined_call_operand.hbm [shape: bf16[128,128], index: 6, kind: input, shape index: {}]
  %s7 = inlined_call_operand.vmem [shape: f32[1,128], index: 7, kind: input, shape index: {}]
  %s8 = inlined_call_operand.hbm [shape: f32[16,128], index: 8, kind: output, shape index: {}]
  %s9 = sld [smem:[#allocation0]]
  $region62: #{tpu_custom_call.1} parent=0
    _
  %s11 = ssub.s32 1, %s9
  %s12 = scalar_select 0, %s11, %s9
  $region1: #{tpu_custom_call.1} parent=0
    #allocation2 [shape = 'u8[512]{0}', space=smem, size = 0x200, scoped, tag = 'input window, operand 0, single buffered']
    #allocation3 [shape = 's32[1]{0}', space=sflag, size = 0x4, scoped, tag = 'scoped memory for tpu_custom_call.1']
    #allocation4 [shape = 's32[1]{0}', space=sflag, size = 0x4, scoped, tag = 'scoped memory for tpu_custom_call.1']
    #allocation5 [shape = 's32[1]{0}', space=sflag, size = 0x4, scoped, tag = 'scoped memory for tpu_custom_call.1']
    #allocation6 [shape = 'u8[4096]{0}', space=vmem, size = 0x1000, scoped, tag = 'input window, operand 1, single buffered']
    #allocation7 [shape = 'u8[65536]{0}', space=vmem, size = 0x10000, scoped, tag = 'input window, operand 2, single buffered']
    #allocation8 [shape = 's32[1]{0}', space=sflag, size = 0x4, scoped, tag = 'scoped memory for tpu_custom_call.1']
    #allocation9 [shape = 'u8[32768]{0}', space=vmem, size = 0x8000, scoped, tag = 'input window, operand 4, single buffered']
    #allocation10 [shape = 'u8[32768]{0}', space=vmem, size = 0x8000, scoped, tag = 'input window, operand 6, single buffered']
    #allocation11 [shape = 's32[1]{0}', space=sflag, size = 0x4, scoped, tag = 'scoped memory for tpu_custom_call.1']
    #allocation12 [shape = 'u8[8192]{0}', space=vmem, size = 0x2000, scoped, tag = 'output window, operand 0, single buffered']
    %13 = vsyncpa [#allocation5], 0
    %14 = vsyncpa [#allocation3], 0
    %15 = vsyncpa [#allocation8], 0
    %16 = vsyncpa [#allocation11], 0
    %17 = vsyncpa [#allocation4], 0
    // Predicated region
    $region2: #{tpu_custom_call.1} parent=1 // pred_check
      _
    $region3: #{tpu_custom_call.1} parent=1 // pred_check_branch
      %19 = sbr.rel (0) target = $region5
    $region4: #{tpu_custom_call.1} parent=1 // pred_region
      %s21 = ssub.s32 16, 16
      %22 = vsyncadd [#allocation5], %s21
      %25 = dma.hbm_to_smem %s0, 16, [#allocation2], [#allocation5]
    $region5: #{tpu_custom_call.1} parent=1 // pred_fallthru
      _
    // Predicated region
    $region6: #{tpu_custom_call.1} parent=1 // pred_check
      _
    $region7: #{tpu_custom_call.1} parent=1 // pred_check_branch
      %27 = sbr.rel (0) target = $region9
    $region8: #{tpu_custom_call.1} parent=1 // pred_region
      %s29 = ssub.s32 128, 128
      %30 = vsyncadd [#allocation3], %s29
      %s31 = sshll.u32 [#allocation6], 4
      %s32 = int_to_ptr.vmem [resolvable:$true] %s31
      %37 = dma.hbm_to_vmem [thread:$0]  %s1, 128, %s32, [#allocation3], 64, 64, 4
    $region9: #{tpu_custom_call.1} parent=1 // pred_fallthru
      _
    // Predicated region
    $region10: #{tpu_custom_call.1} parent=1 // pred_check
      _
    $region11: #{tpu_custom_call.1} parent=1 // pred_check_branch
      %39 = sbr.rel (0) target = $region13
    $region12: #{tpu_custom_call.1} parent=1 // pred_region
      %s41 = ssub.s32 2048, 2048
      %42 = vsyncadd [#allocation8], %s41
      %s43 = sshll.u32 [#allocation7], 4
      %s44 = int_to_ptr.vmem [resolvable:$true] %s43
      %49 = dma.hbm_to_vmem [thread:$0]  %s2, 2048, %s44, [#allocation8], 128, 128, 8
    $region13: #{tpu_custom_call.1} parent=1 // pred_fallthru
      _
    // Predicated region
    $region14: #{tpu_custom_call.1} parent=1 // pred_check
      _
    $region15: #{tpu_custom_call.1} parent=1 // pred_check_branch
      %51 = sbr.rel (0) target = $region17
    $region16: #{tpu_custom_call.1} parent=1 // pred_region
      _
    $region17: #{tpu_custom_call.1} parent=1 // pred_fallthru
      _
    // Predicated region
    $region18: #{tpu_custom_call.1} parent=1 // pred_check
      _
    $region19: #{tpu_custom_call.1} parent=1 // pred_check_branch
      %53 = sbr.rel (0) target = $region21
    $region20: #{tpu_custom_call.1} parent=1 // pred_region
      %s55 = ssub.s32 1024, 1024
      %56 = vsyncadd [#allocation8], %s55
      %s57 = sshll.u32 [#allocation9], 4
      %s58 = int_to_ptr.vmem [resolvable:$true] %s57
      %63 = dma.hbm_to_vmem [thread:$0]  %s4, 1024, %s58, [#allocation8], 64, 64, 4
    $region21: #{tpu_custom_call.1} parent=1 // pred_fallthru
      _
    // Predicated region
    $region22: #{tpu_custom_call.1} parent=1 // pred_check
      _
    $region23: #{tpu_custom_call.1} parent=1 // pred_check_branch
      %65 = sbr.rel (0) target = $region25
    $region24: #{tpu_custom_call.1} parent=1 // pred_region
      _
    $region25: #{tpu_custom_call.1} parent=1 // pred_fallthru
      _
    // Predicated region
    $region26: #{tpu_custom_call.1} parent=1 // pred_check
      _
    $region27: #{tpu_custom_call.1} parent=1 // pred_check_branch
      %67 = sbr.rel (0) target = $region29
    $region28: #{tpu_custom_call.1} parent=1 // pred_region
      %s69 = ssub.s32 1024, 1024
      %70 = vsyncadd [#allocation11], %s69
      %s71 = sshll.u32 [#allocation10], 4
      %s72 = int_to_ptr.vmem [resolvable:$true] %s71
      %77 = dma.hbm_to_vmem [thread:$0]  %s6, 1024, %s72, [#allocation11], 64, 64, 4
    $region29: #{tpu_custom_call.1} parent=1 // pred_fallthru
      _
    // Predicated region
    $region30: #{tpu_custom_call.1} parent=1 // pred_check
      _
    $region31: #{tpu_custom_call.1} parent=1 // pred_check_branch
      %79 = sbr.rel (0) target = $region33
    $region32: #{tpu_custom_call.1} parent=1 // pred_region
      _
    $region33: #{tpu_custom_call.1} parent=1 // pred_fallthru
      _
    // Predicated region
    $region34: #{tpu_custom_call.1} parent=1 // pred_check
      _
    $region35: #{tpu_custom_call.1} parent=1 // pred_check_branch
      %81 = sbr.rel (0) target = $region37
    $region36: #{tpu_custom_call.1} parent=1 // pred_region
      %82 = dma.done [#allocation5], 16
    $region37: #{tpu_custom_call.1} parent=1 // pred_fallthru
      _
    // Predicated region
    $region38: #{tpu_custom_call.1} parent=1 // pred_check
      _
    $region39: #{tpu_custom_call.1} parent=1 // pred_check_branch
      %84 = sbr.rel (0) target = $region41
    $region40: #{tpu_custom_call.1} parent=1 // pred_region
      %85 = dma.done [#allocation3], 128
    $region41: #{tpu_custom_call.1} parent=1 // pred_fallthru
      _
    // Predicated region
    $region42: #{tpu_custom_call.1} parent=1 // pred_check
      _
    $region43: #{tpu_custom_call.1} parent=1 // pred_check_branch
      %87 = sbr.rel (0) target = $region45
    $region44: #{tpu_custom_call.1} parent=1 // pred_region
      %88 = dma.done [#allocation8], 2048
    $region45: #{tpu_custom_call.1} parent=1 // pred_fallthru
      _
    // Predicated region
    $region46: #{tpu_custom_call.1} parent=1 // pred_check
      _
    $region47: #{tpu_custom_call.1} parent=1 // pred_check_branch
      %90 = sbr.rel (0) target = $region49
    $region48: #{tpu_custom_call.1} parent=1 // pred_region
      %91 = dma.done [#allocation8], 1024
    $region49: #{tpu_custom_call.1} parent=1 // pred_fallthru
      _
    // Predicated region
    $region50: #{tpu_custom_call.1} parent=1 // pred_check
      _
    $region51: #{tpu_custom_call.1} parent=1 // pred_check_branch
      %93 = sbr.rel (0) target = $region53
    $region52: #{tpu_custom_call.1} parent=1 // pred_region
      %94 = dma.done [#allocation11], 1024
    $region53: #{tpu_custom_call.1} parent=1 // pred_fallthru
      _
    %95 = sfence
    %s97 = sld [smem:[#allocation2]]
    %s98 = sld [smem:[#allocation2 + $0x1]]
    %s99 = sld [smem:[#allocation2 + $0x2]]
    %v100 = vld [vmem:[#allocation6] sm:$0xf]
    %v101 = vld [vmem:[#allocation6 + $0x4] sm:$0xf]
    %v102 = vld [vmem:[#allocation7] sm:$0xff]
    %v103 = vld [vmem:[#allocation7 + $0x8] sm:$0xff]
    %v104 = vld [vmem:[#allocation7 + $0x10] sm:$0xff]
    %v105 = vld [vmem:[#allocation7 + $0x18] sm:$0xff]
    %v106 = vld [vmem:[#allocation7 + $0x20] sm:$0xff]
    %v107 = vld [vmem:[#allocation7 + $0x28] sm:$0xff]
    %v108 = vld [vmem:[#allocation7 + $0x30] sm:$0xff]
    %v109 = vld [vmem:[#allocation7 + $0x38] sm:$0xff]
    %v110 = vld [vmem:[#allocation7 + $0x40] sm:$0xff]
    %v111 = vld [vmem:[#allocation7 + $0x48] sm:$0xff]
    %v112 = vld [vmem:[#allocation7 + $0x50] sm:$0xff]
    %v113 = vld [vmem:[#allocation7 + $0x58] sm:$0xff]
    %v114 = vld [vmem:[#allocation7 + $0x60] sm:$0xff]
    %v115 = vld [vmem:[#allocation7 + $0x68] sm:$0xff]
    %v116 = vld [vmem:[#allocation7 + $0x70] sm:$0xff]
    %v117 = vld [vmem:[#allocation7 + $0x78] sm:$0xff]
    %v118 = vld [vmem:[%s3] sm:$0x3]
    %v120 = vlaneseq
    %v121 = vshrl.u32 %v120, 7
    %v122 = vsub.s32 0, %v121
    %v123 = vrot.slane %v118, %v122
    %v124 = vlaneseq
    %v125 = vshrl.u32 %v124, 7
    %v126 = vsub.s32 1, %v125
    %v127 = vrot.slane %v118, %v126
    %v132 = vunpack.c.l.b16 %v100
    %v133 = vunpack.c.l.b16 %v101
    %v134 = vpack.c.b16 %v133, %v132
    %v152 = vunpack.c.l.b16 %v102
    %v153 = vunpack.c.h.b16 %v102
    %v154 = vunpack.c.l.b16 %v103
    %v155 = vunpack.c.h.b16 %v103
    %v156 = vunpack.c.l.b16 %v104
    %v157 = vunpack.c.h.b16 %v104
    %v158 = vunpack.c.l.b16 %v105
    %v159 = vunpack.c.h.b16 %v105
    %v160 = vunpack.c.l.b16 %v106
    %v161 = vunpack.c.h.b16 %v106
    %v162 = vunpack.c.l.b16 %v107
    %v163 = vunpack.c.h.b16 %v107
    %v164 = vunpack.c.l.b16 %v108
    %v165 = vunpack.c.h.b16 %v108
    %v166 = vunpack.c.l.b16 %v109
    %v167 = vunpack.c.h.b16 %v109
    %v168 = vunpack.c.l.b16 %v110
    %v169 = vunpack.c.h.b16 %v110
    %v170 = vunpack.c.l.b16 %v111
    %v171 = vunpack.c.h.b16 %v111
    %v172 = vunpack.c.l.b16 %v112
    %v173 = vunpack.c.h.b16 %v112
    %v174 = vunpack.c.l.b16 %v113
    %v175 = vunpack.c.h.b16 %v113
    %v176 = vunpack.c.l.b16 %v114
    %v177 = vunpack.c.h.b16 %v114
    %v178 = vunpack.c.l.b16 %v115
    %v179 = vunpack.c.h.b16 %v115
    %v180 = vunpack.c.l.b16 %v116
    %v181 = vunpack.c.h.b16 %v116
    %v182 = vunpack.c.l.b16 %v117
    %v183 = vunpack.c.h.b16 %v117
    %v184 = vpack.c.b16 %v154, %v152
    %v185 = vpack.c.b16 %v155, %v153
    %v186 = vpack.c.b16 %v158, %v156
    %v187 = vpack.c.b16 %v159, %v157
    %v188 = vpack.c.b16 %v162, %v160
    %v189 = vpack.c.b16 %v163, %v161
    %v190 = vpack.c.b16 %v166, %v164
    %v191 = vpack.c.b16 %v167, %v165
    %v192 = vpack.c.b16 %v170, %v168
    %v193 = vpack.c.b16 %v171, %v169
    %v194 = vpack.c.b16 %v174, %v172
    %v195 = vpack.c.b16 %v175, %v173
    %v196 = vpack.c.b16 %v178, %v176
    %v197 = vpack.c.b16 %v179, %v177
    %v198 = vpack.c.b16 %v182, %v180
    %v199 = vpack.c.b16 %v183, %v181
    %216 = vmatprep.subr.bf16.mxu0 %v199
    %217 = vmatpush1.bf16.msra.mxu0 %v198
    %218 = vmatprep.subr.bf16.mxu0 %v197
    %219 = vmatpush1.bf16.msra.mxu0 %v196
    %220 = vmatprep.subr.bf16.mxu0 %v195
    %221 = vmatpush1.bf16.msra.mxu0 %v194
    %222 = vmatprep.subr.bf16.mxu0 %v193
    %223 = vmatpush1.bf16.msra.mxu0 %v192
    %224 = vmatprep.subr.bf16.mxu0 %v191
    %225 = vmatpush1.bf16.msra.mxu0 %v190
    %226 = vmatprep.subr.bf16.mxu0 %v189
    %227 = vmatpush1.bf16.msra.mxu0 %v188
    %228 = vmatprep.subr.bf16.mxu0 %v187
    %229 = vmatpush1.bf16.msra.mxu0 %v186
    %230 = vmatprep.subr.bf16.mxu0 %v185
    %231 = vmatpush1.bf16.msra.mxu0 %v184
    %232 = vmatprep.subr.bf16.mxu0 0
    %233 = vmatpush2.bf16.msra.mxu0 0
    %234 = vmatprep.subr.bf16.mxu0 0
    %235 = vmatpush2.bf16.msra.mxu0 0
    %236 = vmatprep.subr.bf16.mxu0 0
    %237 = vmatpush2.bf16.msra.mxu0 0
    %238 = vmatprep.subr.bf16.mxu0 0
    %239 = vmatpush2.bf16.msra.mxu0 0
    %240 = vmatprep.subr.bf16.mxu0 0
    %241 = vmatpush2.bf16.msra.mxu0 0
    %242 = vmatprep.subr.bf16.mxu0 0
    %243 = vmatpush2.bf16.msra.mxu0 0
    %244 = vmatprep.subr.bf16.mxu0 0
    %245 = vmatpush2.bf16.msra.mxu0 0
    %246 = vmatprep.subr.bf16.mxu0 0
    %247 = vmatpush2.bf16.msra.mxu0 0
    %248 = vmatprep.mubr.bf16.mxu0 0
    %249 = vmatmul.mubr.bf16.gmra.mxu0 %v134
    %v250 = vpop.f32.mrf.mxu0
    %v251 = vadd.f32 %v123, %v250
    %v252 = vpop.f32.mrf.mxu0
    %v253 = vadd.f32 %v127, %v252
    %v254 = vpop.f32.mrf.mxu0
    %v255 = vadd.f32 %v123, %v254
    %v256 = vpop.f32.mrf.mxu0
    %v257 = vadd.f32 %v127, %v256
    %258 = vdwg.mxu0
    %vm259 = vcmp.gt.f32.partialorder %v251, 0.0
    %vm260 = vcmp.gt.f32.partialorder %v255, 0.0
    %v261 = vstv %s97
    %v262 = vmul.f32 %v261, %v251
    %v263 = vmul.f32 %v261, %v255
    %v264 = vsel %vm259, %v251, %v262
    %v265 = vsel %vm260, %v255, %v263
    %v266 = vpack.c.bf16 %v265, %v264
    %v267 = vld [vmem:[#allocation9] sm:$0xf]
    %v268 = vld [vmem:[#allocation9 + $0x4] sm:$0xf]
    %v269 = vld [vmem:[#allocation9 + $0x8] sm:$0xf]
    %v270 = vld [vmem:[#allocation9 + $0xc] sm:$0xf]
    %v271 = vld [vmem:[#allocation9 + $0x10] sm:$0xf]
    %v272 = vld [vmem:[#allocation9 + $0x14] sm:$0xf]
    %v273 = vld [vmem:[#allocation9 + $0x18] sm:$0xf]
    %v274 = vld [vmem:[#allocation9 + $0x1c] sm:$0xf]
    %v275 = vld [vmem:[#allocation9 + $0x20] sm:$0xf]
    %v276 = vld [vmem:[#allocation9 + $0x24] sm:$0xf]
    %v277 = vld [vmem:[#allocation9 + $0x28] sm:$0xf]
    %v278 = vld [vmem:[#allocation9 + $0x2c] sm:$0xf]
    %v279 = vld [vmem:[#allocation9 + $0x30] sm:$0xf]
    %v280 = vld [vmem:[#allocation9 + $0x34] sm:$0xf]
    %v281 = vld [vmem:[#allocation9 + $0x38] sm:$0xf]
    %v282 = vld [vmem:[#allocation9 + $0x3c] sm:$0xf]
    %v283 = vld [vmem:[%s5] sm:$0x1]
    %v285 = vlaneseq
    %v286 = vshrl.u32 %v285, 7
    %v287 = vsub.s32 0, %v286
    %v288 = vrot.slane %v283, %v287
    %v306 = vunpack.c.l.b16 %v267
    %v307 = vunpack.c.l.b16 %v268
    %v308 = vunpack.c.l.b16 %v269
    %v309 = vunpack.c.l.b16 %v270
    %v310 = vunpack.c.l.b16 %v271
    %v311 = vunpack.c.l.b16 %v272
    %v312 = vunpack.c.l.b16 %v273
    %v313 = vunpack.c.l.b16 %v274
    %v314 = vunpack.c.l.b16 %v275
    %v315 = vunpack.c.l.b16 %v276
    %v316 = vunpack.c.l.b16 %v277
    %v317 = vunpack.c.l.b16 %v278
    %v318 = vunpack.c.l.b16 %v279
    %v319 = vunpack.c.l.b16 %v280
    %v320 = vunpack.c.l.b16 %v281
    %v321 = vunpack.c.l.b16 %v282
    %v322 = vpack.c.b16 %v307, %v306
    %v323 = vpack.c.b16 %v309, %v308
    %v324 = vpack.c.b16 %v311, %v310
    %v325 = vpack.c.b16 %v313, %v312
    %v326 = vpack.c.b16 %v315, %v314
    %v327 = vpack.c.b16 %v317, %v316
    %v328 = vpack.c.b16 %v319, %v318
    %v329 = vpack.c.b16 %v321, %v320
    %338 = vmatprep.subr.bf16.mxu0 0
    %339 = vmatpush1.bf16.msra.mxu0 %v329
    %340 = vmatprep.subr.bf16.mxu0 0
    %341 = vmatpush1.bf16.msra.mxu0 %v328
    %342 = vmatprep.subr.bf16.mxu0 0
    %343 = vmatpush1.bf16.msra.mxu0 %v327
    %344 = vmatprep.subr.bf16.mxu0 0
    %345 = vmatpush1.bf16.msra.mxu0 %v326
    %346 = vmatprep.subr.bf16.mxu0 0
    %347 = vmatpush1.bf16.msra.mxu0 %v325
    %348 = vmatprep.subr.bf16.mxu0 0
    %349 = vmatpush1.bf16.msra.mxu0 %v324
    %350 = vmatprep.subr.bf16.mxu0 0
    %351 = vmatpush1.bf16.msra.mxu0 %v323
    %352 = vmatprep.subr.bf16.mxu0 0
    %353 = vmatpush1.bf16.msra.mxu0 %v322
    %354 = vmatprep.subr.bf16.mxu0 0
    %355 = vmatpush2.bf16.msra.mxu0 0
    %356 = vmatprep.subr.bf16.mxu0 0
    %357 = vmatpush2.bf16.msra.mxu0 0
    %358 = vmatprep.subr.bf16.mxu0 0
    %359 = vmatpush2.bf16.msra.mxu0 0
    %360 = vmatprep.subr.bf16.mxu0 0
    %361 = vmatpush2.bf16.msra.mxu0 0
    %362 = vmatprep.subr.bf16.mxu0 0
    %363 = vmatpush2.bf16.msra.mxu0 0
    %364 = vmatprep.subr.bf16.mxu0 0
    %365 = vmatpush2.bf16.msra.mxu0 0
    %366 = vmatprep.subr.bf16.mxu0 0
    %367 = vmatpush2.bf16.msra.mxu0 0
    %368 = vmatprep.subr.bf16.mxu0 0
    %369 = vmatpush2.bf16.msra.mxu0 0
    %370 = vmatprep.mubr.bf16.mxu0 0
    %371 = vmatmul.mubr.bf16.gmra.mxu0 %v266
    %v372 = vpop.f32.mrf.mxu0
    %v373 = vadd.f32 %v288, %v372
    %v374 = vpop.f32.mrf.mxu0
    %v375 = vpop.f32.mrf.mxu0
    %v376 = vadd.f32 %v288, %v375
    %v377 = vpop.f32.mrf.mxu0
    %378 = vdwg.mxu0
    %vm379 = vcmp.gt.f32.partialorder %v373, 0.0
    %vm380 = vcmp.gt.f32.partialorder %v376, 0.0
    %v381 = vstv %s98
    %v382 = vmul.f32 %v381, %v373
    %v383 = vmul.f32 %v381, %v376
    %v384 = vsel %vm379, %v373, %v382
    %v385 = vsel %vm380, %v376, %v383
    %v386 = vpack.c.bf16 %v385, %v384
    %v387 = vld [vmem:[#allocation10] sm:$0xf]
    %v388 = vld [vmem:[#allocation10 + $0x4] sm:$0xf]
    %v389 = vld [vmem:[#allocation10 + $0x8] sm:$0xf]
    %v390 = vld [vmem:[#allocation10 + $0xc] sm:$0xf]
    %v391 = vld [vmem:[#allocation10 + $0x10] sm:$0xf]
    %v392 = vld [vmem:[#allocation10 + $0x14] sm:$0xf]
    %v393 = vld [vmem:[#allocation10 + $0x18] sm:$0xf]
    %v394 = vld [vmem:[#allocation10 + $0x1c] sm:$0xf]
    %v395 = vld [vmem:[#allocation10 + $0x20] sm:$0xf]
    %v396 = vld [vmem:[#allocation10 + $0x24] sm:$0xf]
    %v397 = vld [vmem:[#allocation10 + $0x28] sm:$0xf]
    %v398 = vld [vmem:[#allocation10 + $0x2c] sm:$0xf]
    %v399 = vld [vmem:[#allocation10 + $0x30] sm:$0xf]
    %v400 = vld [vmem:[#allocation10 + $0x34] sm:$0xf]
    %v401 = vld [vmem:[#allocation10 + $0x38] sm:$0xf]
    %v402 = vld [vmem:[#allocation10 + $0x3c] sm:$0xf]
    %v403 = vld [vmem:[%s7] sm:$0x1]
    %v405 = vlaneseq
    %v406 = vshrl.u32 %v405, 7
    %v407 = vsub.s32 0, %v406
    %v408 = vrot.slane %v403, %v407
    %v426 = vunpack.c.l.b16 %v387
    %v427 = vunpack.c.l.b16 %v388
    %v428 = vunpack.c.l.b16 %v389
    %v429 = vunpack.c.l.b16 %v390
    %v430 = vunpack.c.l.b16 %v391
    %v431 = vunpack.c.l.b16 %v392
    %v432 = vunpack.c.l.b16 %v393
    %v433 = vunpack.c.l.b16 %v394
    %v434 = vunpack.c.l.b16 %v395
    %v435 = vunpack.c.l.b16 %v396
    %v436 = vunpack.c.l.b16 %v397
    %v437 = vunpack.c.l.b16 %v398
    %v438 = vunpack.c.l.b16 %v399
    %v439 = vunpack.c.l.b16 %v400
    %v440 = vunpack.c.l.b16 %v401
    %v441 = vunpack.c.l.b16 %v402
    %v442 = vpack.c.b16 %v427, %v426
    %v443 = vpack.c.b16 %v429, %v428
    %v444 = vpack.c.b16 %v431, %v430
    %v445 = vpack.c.b16 %v433, %v432
    %v446 = vpack.c.b16 %v435, %v434
    %v447 = vpack.c.b16 %v437, %v436
    %v448 = vpack.c.b16 %v439, %v438
    %v449 = vpack.c.b16 %v441, %v440
    %458 = vmatprep.subr.bf16.mxu0 0
    %459 = vmatpush1.bf16.msra.mxu0 %v449
    %460 = vmatprep.subr.bf16.mxu0 0
    %461 = vmatpush1.bf16.msra.mxu0 %v448
    %462 = vmatprep.subr.bf16.mxu0 0
    %463 = vmatpush1.bf16.msra.mxu0 %v447
    %464 = vmatprep.subr.bf16.mxu0 0
    %465 = vmatpush1.bf16.msra.mxu0 %v446
    %466 = vmatprep.subr.bf16.mxu0 0
    %467 = vmatpush1.bf16.msra.mxu0 %v445
    %468 = vmatprep.subr.bf16.mxu0 0
    %469 = vmatpush1.bf16.msra.mxu0 %v444
    %470 = vmatprep.subr.bf16.mxu0 0
    %471 = vmatpush1.bf16.msra.mxu0 %v443
    %472 = vmatprep.subr.bf16.mxu0 0
    %473 = vmatpush1.bf16.msra.mxu0 %v442
    %474 = vmatprep.subr.bf16.mxu0 0
    %475 = vmatpush2.bf16.msra.mxu0 0
    %476 = vmatprep.subr.bf16.mxu0 0
    %477 = vmatpush2.bf16.msra.mxu0 0
    %478 = vmatprep.subr.bf16.mxu0 0
    %479 = vmatpush2.bf16.msra.mxu0 0
    %480 = vmatprep.subr.bf16.mxu0 0
    %481 = vmatpush2.bf16.msra.mxu0 0
    %482 = vmatprep.subr.bf16.mxu0 0
    %483 = vmatpush2.bf16.msra.mxu0 0
    %484 = vmatprep.subr.bf16.mxu0 0
    %485 = vmatpush2.bf16.msra.mxu0 0
    %486 = vmatprep.subr.bf16.mxu0 0
    %487 = vmatpush2.bf16.msra.mxu0 0
    %488 = vmatprep.subr.bf16.mxu0 0
    %489 = vmatpush2.bf16.msra.mxu0 0
    %490 = vmatprep.mubr.bf16.mxu0 0
    %491 = vmatmul.mubr.bf16.gmra.mxu0 %v386
    %v492 = vpop.f32.mrf.mxu0
    %v493 = vadd.f32 %v408, %v492
    %v494 = vpop.f32.mrf.mxu0
    %v495 = vpop.f32.mrf.mxu0
    %v496 = vadd.f32 %v408, %v495
    %v497 = vpop.f32.mrf.mxu0
    %498 = vdwg.mxu0
    %vm499 = vcmp.gt.f32.partialorder %v493, 0.0
    %vm500 = vcmp.gt.f32.partialorder %v496, 0.0
    %v501 = vstv %s99
    %v502 = vmul.f32 %v501, %v493
    %v503 = vmul.f32 %v501, %v496
    %v504 = vsel %vm499, %v493, %v502
    %v505 = vsel %vm500, %v496, %v503
    %v506 = vadd.f32 %v504, %v253
    %v507 = vadd.f32 %v505, %v257
    %508 = vst [vmem:[#allocation12] sm:$0xff] %v506
    %509 = vst [vmem:[#allocation12 + $0x8] sm:$0xff] %v507
    // Predicated region
    $region54: #{tpu_custom_call.1} parent=1 // pred_check
      _
    $region55: #{tpu_custom_call.1} parent=1 // pred_check_branch
      %511 = sbr.rel (0) target = $region57
    $region56: #{tpu_custom_call.1} parent=1 // pred_region
      %s513 = ssub.s32 256, 256
      %514 = vsyncadd [#allocation4], %s513
      %s515 = sshll.u32 [#allocation12], 4
      %s516 = int_to_ptr.vmem [resolvable:$true] %s515
      %521 = dma.vmem_to_hbm [thread:$0]  %s516, 256, %s8, [#allocation4], 128, 128, 8
    $region57: #{tpu_custom_call.1} parent=1 // pred_fallthru
      _
    // Predicated region
    $region58: #{tpu_custom_call.1} parent=1 // pred_check
      _
    $region59: #{tpu_custom_call.1} parent=1 // pred_check_branch
      %523 = sbr.rel (0) target = $region61
    $region60: #{tpu_custom_call.1} parent=1 // pred_region
      %524 = dma.done [#allocation4], 256
    $region61: #{tpu_custom_call.1} parent=1 // pred_fallthru
      _
    %525 = vsyncpa [#allocation3], 1
    %526 = vsyncpa [#allocation8], 1
    %527 = vsyncpa [#allocation11], 1
    %528 = vsyncpa [#allocation4], 1
    %529 = vsyncpa [#allocation5], 1

</llo_original>
